<compile_context>
chip_gen: v7x
topology: tpu7x:2x2x1
jax: 0.10.0
libtpu: 0.0.40
codegen_flags: <defaults>
</compile_context>

<pallas_src>
import jax
import jax.numpy as jnp
from jax.experimental import pallas as pl
from jax.experimental.pallas import tpu as pltpu

INPUT_SIZE = 784
HIDDEN_SIZE = 128
NUM_CLASSES = 10

C_PAD = 128      # lane-dense fc2 output width (real logits live in [:, :10])
TB_MAX = 1024    # max batch-tile rows per grid step


def _round_up(n: int, m: int) -> int:
    return ((n + m - 1) // m) * m


def mlp_kernel(x_ref, w1_ref, b1_ref, w2_ref, b2_ref, o_ref):
    # x arrives straight from HBM as f32; cast to bf16 in-register for the MXU
    # (avoids a separate host-side cast+pad pass over x).
    x = x_ref[...].astype(jnp.bfloat16)                          # (TB, 784)
    # fc1 on the MXU (K = 784, f32 accumulation).
    h = jnp.dot(x, w1_ref[...], preferred_element_type=jnp.float32)
    # bias + ReLU on the VPU in f32.
    h = jnp.maximum(h + b1_ref[...], 0.0)
    # fc2: bf16 operands, f32 accumulation.
    out = jnp.dot(h.astype(jnp.bfloat16), w2_ref[...],
                  preferred_element_type=jnp.float32)
    # bf16 logits halve the writeback + wrapper-slice read traffic.
    o_ref[...] = (out + b2_ref[...]).astype(o_ref.dtype)


def neural_net_forward(x, w1, b1, w2, b2):
    """Forward pass matching PyTorch NeuralNet.

    x:  (B, 784) float32
    w1: (784, 128), b1: (1, 128), w2: (128, 10), b2: (1, 10)   (all float32)
    returns (B, 10) in x.dtype
    """
    B = x.shape[0]
    orig_dtype = x.dtype

    # Only tiny batches (< 8 rows) are ever padded; otherwise x goes into the
    # kernel untouched (no HBM copy of x).
    if B < 8:
        x = jnp.pad(x, ((0, 8 - B), (0, 0)))
    B_in = x.shape[0]

    # Batch tile: multiple of 8 sublanes, capped at TB_MAX; when there is
    # enough work, guarantee >= 2 grid steps so v7x's two TensorCores both
    # get a share of the batch.  The ragged last block is masked by Pallas.
    if B_in >= 16:
        TB = min(TB_MAX, _round_up(pl.cdiv(B_in, 2), 8))
    else:
        TB = 8
    grid = (pl.cdiv(B_in, TB),)

    # Weight prep is tiny (w1 is 784x128) and fuses under jit.
    w1_p = w1.astype(jnp.bfloat16)                                # (784, 128)
    b1_p = b1.reshape(1, HIDDEN_SIZE).astype(jnp.float32)         # (1, 128)
    w2_p = jnp.pad(w2.astype(jnp.bfloat16),
                   ((0, 0), (0, C_PAD - NUM_CLASSES)))            # (128, 128)
    b2_p = jnp.pad(b2.reshape(1, NUM_CLASSES).astype(jnp.float32),
                   ((0, 0), (0, C_PAD - NUM_CLASSES)))            # (1, 128)

    out_p = pl.pallas_call(
        mlp_kernel,
        out_shape=jax.ShapeDtypeStruct((B_in, C_PAD), jnp.bfloat16),
        grid=grid,
        in_specs=[
            pl.BlockSpec((TB, INPUT_SIZE), lambda i: (i, 0)),           # x: streamed
            pl.BlockSpec((INPUT_SIZE, HIDDEN_SIZE), lambda i: (0, 0)),  # w1: resident
            pl.BlockSpec((1, HIDDEN_SIZE), lambda i: (0, 0)),           # b1: resident
            pl.BlockSpec((HIDDEN_SIZE, C_PAD), lambda i: (0, 0)),       # w2: resident
            pl.BlockSpec((1, C_PAD), lambda i: (0, 0)),                 # b2: resident
        ],
        out_specs=pl.BlockSpec((TB, C_PAD), lambda i: (i, 0)),
        compiler_params=pltpu.CompilerParams(
            dimension_semantics=("parallel",),   # lets v7x shard the batch across both TCs
        ),
    )(x, w1_p, b1_p, w2_p, b2_p)

    return out_p[:B, :NUM_CLASSES].astype(orig_dtype)


neural_net_forward_jit = jax.jit(neural_net_forward)


def init_params(key):
    """Deterministic init mimicking nn.Linear's uniform(-1/sqrt(fan_in), 1/sqrt(fan_in))."""
    k1, k2, k3, k4 = jax.random.split(key, 4)
    bound1 = 1.0 / jnp.sqrt(INPUT_SIZE)
    bound2 = 1.0 / jnp.sqrt(HIDDEN_SIZE)
    w1 = jax.random.uniform(k1, (INPUT_SIZE, HIDDEN_SIZE), jnp.float32, -bound1, bound1)
    b1 = jax.random.uniform(k2, (1, HIDDEN_SIZE), jnp.float32, -bound1, bound1)
    w2 = jax.random.uniform(k3, (HIDDEN_SIZE, NUM_CLASSES), jnp.float32, -bound2, bound2)
    b2 = jax.random.uniform(k4, (1, NUM_CLASSES), jnp.float32, -bound2, bound2)
    return w1, b1, w2, b2


if __name__ == "__main__":
    key = jax.random.PRNGKey(0)
    kx, kp = jax.random.split(key)
    B = 8   # small test batch; tiling / TC split pays off at large B
    x = jax.random.normal(kx, (B, INPUT_SIZE), jnp.float32)
    w1, b1, w2, b2 = init_params(kp)

    out = neural_net_forward_jit(x, w1, b1, w2, b2)
    out = jax.block_until_ready(out)
    assert out.shape == (B, NUM_CLASSES)

    # Reference with the same bf16 operand rounding (f32 accumulation) and the
    # kernel's final bf16 logit store.
    f32 = jnp.float32
    xb = x.astype(jnp.bfloat16).astype(f32)
    w1b = w1.astype(jnp.bfloat16).astype(f32)
    w2b = w2.astype(jnp.bfloat16).astype(f32)
    h_ref = jnp.maximum(xb @ w1b + b1, 0.0)
    ref = h_ref.astype(jnp.bfloat16).astype(f32) @ w2b + b2
    ref_bf16 = ref.astype(jnp.bfloat16).astype(f32)
    assert jnp.allclose(out, ref_bf16, atol=3e-2, rtol=3e-2)

    # Loose check against the pure-f32 PyTorch-equivalent reference.
    ref_f32 = jnp.maximum(x @ w1 + b1, 0.0) @ w2 + b2
    assert jnp.allclose(out, ref_f32, atol=1e-1, rtol=1e-1)

    print("KERNEL_OK")
</pallas_src>

<mosaic_0001>
module attributes {stable_mosaic.version = 11 : i64} {
  func.func @mlp_kernel(%arg0: i32, %arg1: memref<8x784xf32, #tpu.memory_space<vmem>>, %arg2: memref<784x128xbf16, #tpu.memory_space<vmem>>, %arg3: memref<1x128xf32, #tpu.memory_space<vmem>>, %arg4: memref<128x128xbf16, #tpu.memory_space<vmem>>, %arg5: memref<1x128xf32, #tpu.memory_space<vmem>>, %arg6: memref<8x128xbf16, #tpu.memory_space<vmem>>) attributes {dimension_semantics = [#tpu.dimension_semantics<parallel>], iteration_bounds = array<i64: 1>, scalar_prefetch = 0 : i64, scratch_operands = 0 : i64, tpu.core_type = #tpu.core_type<tc>, window_params = [{transform_indices = @transform_0, window_bounds = array<i64: 8, 784>}, {pipeline_mode = #tpu.pipeline_mode<synchronous>, transform_indices = @transform_1, window_bounds = array<i64: 784, 128>}, {pipeline_mode = #tpu.pipeline_mode<synchronous>, transform_indices = @transform_2, window_bounds = array<i64: 1, 128>}, {pipeline_mode = #tpu.pipeline_mode<synchronous>, transform_indices = @transform_3, window_bounds = array<i64: 128, 128>}, {pipeline_mode = #tpu.pipeline_mode<synchronous>, transform_indices = @transform_4, window_bounds = array<i64: 1, 128>}, {transform_indices = @transform_5, window_bounds = array<i64: 8, 128>}]} {
    %c0 = arith.constant 0 : index
    %c0_0 = arith.constant 0 : index
    %0 = vector.load %arg1[%c0, %c0_0] : memref<8x784xf32, #tpu.memory_space<vmem>>, vector<8x784xf32>
    %1 = arith.truncf %0 : vector<8x784xf32> to vector<8x784xbf16>
    %c0_1 = arith.constant 0 : index
    %c0_2 = arith.constant 0 : index
    %2 = vector.load %arg2[%c0_1, %c0_2] : memref<784x128xbf16, #tpu.memory_space<vmem>>, vector<784x128xbf16>
    %cst = arith.constant dense<0.000000e+00> : vector<8x128xf32>
    %3 = tpu.matmul %1, %2, %cst {dimension_numbers = #tpu.dot_dimension_numbers<[1], [0], [0], [1], [0, 0, 1, 1], [], []>} : vector<8x784xbf16>, vector<784x128xbf16>, vector<8x128xf32> -> vector<8x128xf32>
    %c0_3 = arith.constant 0 : index
    %c0_4 = arith.constant 0 : index
    %4 = vector.load %arg3[%c0_3, %c0_4] : memref<1x128xf32, #tpu.memory_space<vmem>>, vector<1x128xf32>
    %5 = vector.broadcast %4 : vector<1x128xf32> to vector<8x128xf32>
    %6 = arith.addf %3, %5 : vector<8x128xf32>
    %cst_5 = arith.constant 0.000000e+00 : f32
    %7 = vector.broadcast %cst_5 : f32 to vector<8x128xf32>
    %8 = arith.maximumf %6, %7 : vector<8x128xf32>
    %9 = arith.truncf %8 : vector<8x128xf32> to vector<8x128xbf16>
    %c0_6 = arith.constant 0 : index
    %c0_7 = arith.constant 0 : index
    %10 = vector.load %arg4[%c0_6, %c0_7] : memref<128x128xbf16, #tpu.memory_space<vmem>>, vector<128x128xbf16>
    %cst_8 = arith.constant dense<0.000000e+00> : vector<8x128xf32>
    %11 = tpu.matmul %9, %10, %cst_8 {dimension_numbers = #tpu.dot_dimension_numbers<[1], [0], [0], [1], [0, 0, 1, 1], [], []>} : vector<8x128xbf16>, vector<128x128xbf16>, vector<8x128xf32> -> vector<8x128xf32>
    %c0_9 = arith.constant 0 : index
    %c0_10 = arith.constant 0 : index
    %12 = vector.load %arg5[%c0_9, %c0_10] : memref<1x128xf32, #tpu.memory_space<vmem>>, vector<1x128xf32>
    %13 = vector.broadcast %12 : vector<1x128xf32> to vector<8x128xf32>
    %14 = arith.addf %11, %13 : vector<8x128xf32>
    %15 = arith.truncf %14 : vector<8x128xf32> to vector<8x128xbf16>
    %c0_11 = arith.constant 0 : index
    %c0_12 = arith.constant 0 : index
    %16 = vector.load %arg6[%c0_11, %c0_12] : memref<8x128xbf16, #tpu.memory_space<vmem>>, vector<8x128xbf16>
    tpu.vector_store %arg6[%c0_11, %c0_12], %15 {strides = array<i32>} : memref<8x128xbf16, #tpu.memory_space<vmem>>, vector<8x128xbf16>,
    return
  }
  func.func @transform_0(%arg0: i32) -> (i32, i32) {
    %c0_i32 = arith.constant 0 : i32
    %c0_i32_0 = arith.constant 0 : i32
    return %arg0, %c0_i32 : i32, i32
  }
  func.func @transform_1(%arg0: i32) -> (i32, i32) {
    %c0_i32 = arith.constant 0 : i32
    %c0_i32_0 = arith.constant 0 : i32
    %c0_i32_1 = arith.constant 0 : i32
    return %c0_i32, %c0_i32_0 : i32, i32
  }
  func.func @transform_2(%arg0: i32) -> (i32, i32) {
    %c0_i32 = arith.constant 0 : i32
    %c0_i32_0 = arith.constant 0 : i32
    %c0_i32_1 = arith.constant 0 : i32
    return %c0_i32, %c0_i32_0 : i32, i32
  }
  func.func @transform_3(%arg0: i32) -> (i32, i32) {
    %c0_i32 = arith.constant 0 : i32
    %c0_i32_0 = arith.constant 0 : i32
    %c0_i32_1 = arith.constant 0 : i32
    return %c0_i32, %c0_i32_0 : i32, i32
  }
  func.func @transform_4(%arg0: i32) -> (i32, i32) {
    %c0_i32 = arith.constant 0 : i32
    %c0_i32_0 = arith.constant 0 : i32
    %c0_i32_1 = arith.constant 0 : i32
    return %c0_i32, %c0_i32_0 : i32, i32
  }
  func.func @transform_5(%arg0: i32) -> (i32, i32) {
    %c0_i32 = arith.constant 0 : i32
    %c0_i32_0 = arith.constant 0 : i32
    return %arg0, %c0_i32 : i32, i32
  }
}

</mosaic_0001>

<llo_original>
// kernel: neural_net_forward.1
$region0: #{neural_net_forward.1}
  #allocation0 [shape = 'u32[]', space=smem, size = 0x4, offset = 0x4, fixed_abs, tag = 'smem constant byte address 0x4 - core index']
  #allocation1 [shape = 'u32[144,128]{1,0:T(1,128)}', space=vmem, size = 0x12000, scoped, tag = 'internal scratch']
  %s0 = inlined_call_operand.vmem [shape: f32[8,784], index: 0, kind: input, shape index: {}]
  %s1 = inlined_call_operand.vmem [shape: bf16[784,128], index: 1, kind: input, shape index: {}]
  %s2 = inlined_call_operand.vmem [shape: f32[1,128], index: 2, kind: input, shape index: {}]
  %s3 = inlined_call_operand.vmem [shape: bf16[128,128], index: 3, kind: input, shape index: {}]
  %s4 = inlined_call_operand.vmem [shape: f32[1,128], index: 4, kind: input, shape index: {}]
  %s5 = inlined_call_operand.vmem [shape: bf16[8,128], index: 5, kind: output, shape index: {}]
  %s6 = sld [smem:[#allocation0]]
  $region30: #{neural_net_forward.1} parent=0
    _
  %s8 = ssub.s32 1, %s6
  %s9 = scalar_select 0, %s8, %s6
  // Predicated region
  $region2: #{neural_net_forward.1} parent=0 // pred_check
    _
  $region3: #{neural_net_forward.1} parent=0 // pred_check_branch
    %11 = sbr.rel (0) target = $region5
  $region4: #{neural_net_forward.1} parent=0 // pred_region
    _
  $region5: #{neural_net_forward.1} parent=0 // pred_fallthru
    _
  // Predicated region
  $region6: #{neural_net_forward.1} parent=0 // pred_check
    _
  $region7: #{neural_net_forward.1} parent=0 // pred_check_branch
    %13 = sbr.rel (0) target = $region9
  $region8: #{neural_net_forward.1} parent=0 // pred_region
    _
  $region9: #{neural_net_forward.1} parent=0 // pred_fallthru
    _
  // Predicated region
  $region10: #{neural_net_forward.1} parent=0 // pred_check
    _
  $region11: #{neural_net_forward.1} parent=0 // pred_check_branch
    %15 = sbr.rel (0) target = $region13
  $region12: #{neural_net_forward.1} parent=0 // pred_region
    _
  $region13: #{neural_net_forward.1} parent=0 // pred_fallthru
    _
  // Predicated region
  $region14: #{neural_net_forward.1} parent=0 // pred_check
    _
  $region15: #{neural_net_forward.1} parent=0 // pred_check_branch
    %17 = sbr.rel (0) target = $region17
  $region16: #{neural_net_forward.1} parent=0 // pred_region
    _
  $region17: #{neural_net_forward.1} parent=0 // pred_fallthru
    _
  // Predicated region
  $region18: #{neural_net_forward.1} parent=0 // pred_check
    _
  $region19: #{neural_net_forward.1} parent=0 // pred_check_branch
    %19 = sbr.rel (0) target = $region21
  $region20: #{neural_net_forward.1} parent=0 // pred_region
    _
  $region21: #{neural_net_forward.1} parent=0 // pred_fallthru
    _
  %v21 = vld [vmem:[%s0] sm:$0xff]
  %v22 = vld [vmem:[%s0 + $0x8] sm:$0xff]
  %v23 = vld [vmem:[%s0 + $0x10] sm:$0xff]
  %v24 = vld [vmem:[%s0 + $0x18] sm:$0xff]
  %v25 = vld [vmem:[%s0 + $0x20] sm:$0xff]
  %v26 = vld [vmem:[%s0 + $0x28] sm:$0xff]
  %v27 = vld [vmem:[%s0 + $0x30] sm:$0xff]
  %v28 = vpack.c.bf16 %v21, %v21
  %v29 = vpack.c.bf16 %v22, %v22
  %v30 = vpack.c.bf16 %v23, %v23
  %v31 = vpack.c.bf16 %v24, %v24
  %v32 = vpack.c.bf16 %v25, %v25
  %v33 = vpack.c.bf16 %v26, %v26
  %v34 = vpack.c.bf16 %v27, %v27
  %v35 = vld [vmem:[%s1] sm:$0xf]
  %v36 = vld [vmem:[%s1 + $0x4] sm:$0xf]
  %v37 = vld [vmem:[%s1 + $0x8] sm:$0xf]
  %v38 = vld [vmem:[%s1 + $0xc] sm:$0xf]
  %v39 = vld [vmem:[%s1 + $0x10] sm:$0xf]
  %v40 = vld [vmem:[%s1 + $0x14] sm:$0xf]
  %v41 = vld [vmem:[%s1 + $0x18] sm:$0xf]
  %v42 = vld [vmem:[%s1 + $0x1c] sm:$0xf]
  %v43 = vld [vmem:[%s1 + $0x20] sm:$0xf]
  %v44 = vld [vmem:[%s1 + $0x24] sm:$0xf]
  %v45 = vld [vmem:[%s1 + $0x28] sm:$0xf]
  %v46 = vld [vmem:[%s1 + $0x2c] sm:$0xf]
  %v47 = vld [vmem:[%s1 + $0x30] sm:$0xf]
  %v48 = vld [vmem:[%s1 + $0x34] sm:$0xf]
  %v49 = vld [vmem:[%s1 + $0x38] sm:$0xf]
  %v50 = vld [vmem:[%s1 + $0x3c] sm:$0xf]
  %v51 = vld [vmem:[%s1 + $0x40] sm:$0xf]
  %v52 = vld [vmem:[%s1 + $0x44] sm:$0xf]
  %v53 = vld [vmem:[%s1 + $0x48] sm:$0xf]
  %v54 = vld [vmem:[%s1 + $0x4c] sm:$0xf]
  %v55 = vld [vmem:[%s1 + $0x50] sm:$0xf]
  %v56 = vld [vmem:[%s1 + $0x54] sm:$0xf]
  %v57 = vld [vmem:[%s1 + $0x58] sm:$0xf]
  %v58 = vld [vmem:[%s1 + $0x5c] sm:$0xf]
  %v59 = vld [vmem:[%s1 + $0x60] sm:$0xf]
  %v60 = vld [vmem:[%s1 + $0x64] sm:$0xf]
  %v61 = vld [vmem:[%s1 + $0x68] sm:$0xf]
  %v62 = vld [vmem:[%s1 + $0x6c] sm:$0xf]
  %v63 = vld [vmem:[%s1 + $0x70] sm:$0xf]
  %v64 = vld [vmem:[%s1 + $0x74] sm:$0xf]
  %v65 = vld [vmem:[%s1 + $0x78] sm:$0xf]
  %v66 = vld [vmem:[%s1 + $0x7c] sm:$0xf]
  %v67 = vld [vmem:[%s1 + $0x80] sm:$0xf]
  %v68 = vld [vmem:[%s1 + $0x84] sm:$0xf]
  %v69 = vld [vmem:[%s1 + $0x88] sm:$0xf]
  %v70 = vld [vmem:[%s1 + $0x8c] sm:$0xf]
  %v71 = vld [vmem:[%s1 + $0x90] sm:$0xf]
  %v72 = vld [vmem:[%s1 + $0x94] sm:$0xf]
  %v73 = vld [vmem:[%s1 + $0x98] sm:$0xf]
  %v74 = vld [vmem:[%s1 + $0x9c] sm:$0xf]
  %v75 = vld [vmem:[%s1 + $0xa0] sm:$0xf]
  %v76 = vld [vmem:[%s1 + $0xa4] sm:$0xf]
  %v77 = vld [vmem:[%s1 + $0xa8] sm:$0xf]
  %v78 = vld [vmem:[%s1 + $0xac] sm:$0xf]
  %v79 = vld [vmem:[%s1 + $0xb0] sm:$0xf]
  %v80 = vld [vmem:[%s1 + $0xb4] sm:$0xf]
  %v81 = vld [vmem:[%s1 + $0xb8] sm:$0xf]
  %v82 = vld [vmem:[%s1 + $0xbc] sm:$0xf]
  %v83 = vld [vmem:[%s1 + $0xc0] sm:$0xf]
  %v84 = vld [vmem:[%s1 + $0xc4] sm:$0xf]
  %v85 = vld [vmem:[%s1 + $0xc8] sm:$0xf]
  %v86 = vld [vmem:[%s1 + $0xcc] sm:$0xf]
  %v87 = vld [vmem:[%s1 + $0xd0] sm:$0xf]
  %v88 = vld [vmem:[%s1 + $0xd4] sm:$0xf]
  %v89 = vld [vmem:[%s1 + $0xd8] sm:$0xf]
  %v90 = vld [vmem:[%s1 + $0xdc] sm:$0xf]
  %v91 = vld [vmem:[%s1 + $0xe0] sm:$0xf]
  %v92 = vld [vmem:[%s1 + $0xe4] sm:$0xf]
  %v93 = vld [vmem:[%s1 + $0xe8] sm:$0xf]
  %v94 = vld [vmem:[%s1 + $0xec] sm:$0xf]
  %v95 = vld [vmem:[%s1 + $0xf0] sm:$0xf]
  %v96 = vld [vmem:[%s1 + $0xf4] sm:$0xf]
  %v97 = vld [vmem:[%s1 + $0xf8] sm:$0xf]
  %v98 = vld [vmem:[%s1 + $0xfc] sm:$0xf]
  %v99 = vld [vmem:[%s1 + $0x100] sm:$0xf]
  %v100 = vld [vmem:[%s1 + $0x104] sm:$0xf]
  %v101 = vld [vmem:[%s1 + $0x108] sm:$0xf]
  %v102 = vld [vmem:[%s1 + $0x10c] sm:$0xf]
  %v103 = vld [vmem:[%s1 + $0x110] sm:$0xf]
  %v104 = vld [vmem:[%s1 + $0x114] sm:$0xf]
  %v105 = vld [vmem:[%s1 + $0x118] sm:$0xf]
  %v106 = vld [vmem:[%s1 + $0x11c] sm:$0xf]
  %v107 = vld [vmem:[%s1 + $0x120] sm:$0xf]
  %v108 = vld [vmem:[%s1 + $0x124] sm:$0xf]
  %v109 = vld [vmem:[%s1 + $0x128] sm:$0xf]
  %v110 = vld [vmem:[%s1 + $0x12c] sm:$0xf]
  %v111 = vld [vmem:[%s1 + $0x130] sm:$0xf]
  %v112 = vld [vmem:[%s1 + $0x134] sm:$0xf]
  %v113 = vld [vmem:[%s1 + $0x138] sm:$0xf]
  %v114 = vld [vmem:[%s1 + $0x13c] sm:$0xf]
  %v115 = vld [vmem:[%s1 + $0x140] sm:$0xf]
  %v116 = vld [vmem:[%s1 + $0x144] sm:$0xf]
  %v117 = vld [vmem:[%s1 + $0x148] sm:$0xf]
  %v118 = vld [vmem:[%s1 + $0x14c] sm:$0xf]
  %v119 = vld [vmem:[%s1 + $0x150] sm:$0xf]
  %v120 = vld [vmem:[%s1 + $0x154] sm:$0xf]
  %v121 = vld [vmem:[%s1 + $0x158] sm:$0xf]
  %v122 = vld [vmem:[%s1 + $0x15c] sm:$0xf]
  %v123 = vld [vmem:[%s1 + $0x160] sm:$0xf]
  %v124 = vld [vmem:[%s1 + $0x164] sm:$0xf]
  %v125 = vld [vmem:[%s1 + $0x168] sm:$0xf]
  %v126 = vld [vmem:[%s1 + $0x16c] sm:$0xf]
  %v127 = vld [vmem:[%s1 + $0x170] sm:$0xf]
  %v128 = vld [vmem:[%s1 + $0x174] sm:$0xf]
  %v129 = vld [vmem:[%s1 + $0x178] sm:$0xf]
  %v130 = vld [vmem:[%s1 + $0x17c] sm:$0xf]
  %v131 = vld [vmem:[%s1 + $0x180] sm:$0xf]
  %v132 = vld [vmem:[%s1 + $0x184] sm:$0xf]
  %v133 = vld [vmem:[%s2] sm:$0x1]
  %v135 = vlaneseq
  %v136 = vshrl.u32 %v135, 7
  %v137 = vsub.s32 0, %v136
  %v138 = vrot.slane %v133, %v137
  %v238 = vunpack.c.l.b16 %v35
  %v239 = vunpack.c.l.b16 %v36
  %v240 = vunpack.c.l.b16 %v37
  %v241 = vunpack.c.l.b16 %v38
  %v242 = vunpack.c.l.b16 %v39
  %v243 = vunpack.c.l.b16 %v40
  %v244 = vunpack.c.l.b16 %v41
  %v245 = vunpack.c.l.b16 %v42
  %v246 = vunpack.c.l.b16 %v43
  %v247 = vunpack.c.l.b16 %v44
  %v248 = vunpack.c.l.b16 %v45
  %v249 = vunpack.c.l.b16 %v46
  %v250 = vunpack.c.l.b16 %v47
  %v251 = vunpack.c.l.b16 %v48
  %v252 = vunpack.c.l.b16 %v49
  %v253 = vunpack.c.l.b16 %v50
  %v254 = vunpack.c.l.b16 %v51
  %v255 = vunpack.c.l.b16 %v52
  %v256 = vunpack.c.l.b16 %v53
  %v257 = vunpack.c.l.b16 %v54
  %v258 = vunpack.c.l.b16 %v55
  %v259 = vunpack.c.l.b16 %v56
  %v260 = vunpack.c.l.b16 %v57
  %v261 = vunpack.c.l.b16 %v58
  %v262 = vunpack.c.l.b16 %v59
  %v263 = vunpack.c.l.b16 %v60
  %v264 = vunpack.c.l.b16 %v61
  %v265 = vunpack.c.l.b16 %v62
  %v266 = vunpack.c.l.b16 %v63
  %v267 = vunpack.c.l.b16 %v64
  %v268 = vunpack.c.l.b16 %v65
  %v269 = vunpack.c.l.b16 %v66
  %v270 = vunpack.c.l.b16 %v67
  %v271 = vunpack.c.l.b16 %v68
  %v272 = vunpack.c.l.b16 %v69
  %v273 = vunpack.c.l.b16 %v70
  %v274 = vunpack.c.l.b16 %v71
  %v275 = vunpack.c.l.b16 %v72
  %v276 = vunpack.c.l.b16 %v73
  %v277 = vunpack.c.l.b16 %v74
  %v278 = vunpack.c.l.b16 %v75
  %v279 = vunpack.c.l.b16 %v76
  %v280 = vunpack.c.l.b16 %v77
  %v281 = vunpack.c.l.b16 %v78
  %v282 = vunpack.c.l.b16 %v79
  %v283 = vunpack.c.l.b16 %v80
  %v284 = vunpack.c.l.b16 %v81
  %v285 = vunpack.c.l.b16 %v82
  %v286 = vunpack.c.l.b16 %v83
  %v287 = vunpack.c.l.b16 %v84
  %v288 = vunpack.c.l.b16 %v85
  %v289 = vunpack.c.l.b16 %v86
  %v290 = vunpack.c.l.b16 %v87
  %v291 = vunpack.c.l.b16 %v88
  %v292 = vunpack.c.l.b16 %v89
  %v293 = vunpack.c.l.b16 %v90
  %v294 = vunpack.c.l.b16 %v91
  %v295 = vunpack.c.l.b16 %v92
  %v296 = vunpack.c.l.b16 %v93
  %v297 = vunpack.c.l.b16 %v94
  %v298 = vunpack.c.l.b16 %v95
  %v299 = vunpack.c.l.b16 %v96
  %v300 = vunpack.c.l.b16 %v97
  %v301 = vunpack.c.l.b16 %v98
  %v302 = vunpack.c.l.b16 %v99
  %v303 = vunpack.c.l.b16 %v100
  %v304 = vunpack.c.l.b16 %v101
  %v305 = vunpack.c.l.b16 %v102
  %v306 = vunpack.c.l.b16 %v103
  %v307 = vunpack.c.l.b16 %v104
  %v308 = vunpack.c.l.b16 %v105
  %v309 = vunpack.c.l.b16 %v106
  %v310 = vunpack.c.l.b16 %v107
  %v311 = vunpack.c.l.b16 %v108
  %v312 = vunpack.c.l.b16 %v109
  %v313 = vunpack.c.l.b16 %v110
  %v314 = vunpack.c.l.b16 %v111
  %v315 = vunpack.c.l.b16 %v112
  %v316 = vunpack.c.l.b16 %v113
  %v317 = vunpack.c.l.b16 %v114
  %v318 = vunpack.c.l.b16 %v115
  %v319 = vunpack.c.l.b16 %v116
  %v320 = vunpack.c.l.b16 %v117
  %v321 = vunpack.c.l.b16 %v118
  %v322 = vunpack.c.l.b16 %v119
  %v323 = vunpack.c.l.b16 %v120
  %v324 = vunpack.c.l.b16 %v121
  %v325 = vunpack.c.l.b16 %v122
  %v326 = vunpack.c.l.b16 %v123
  %v327 = vunpack.c.l.b16 %v124
  %v328 = vunpack.c.l.b16 %v125
  %v329 = vunpack.c.l.b16 %v126
  %v330 = vunpack.c.l.b16 %v127
  %v331 = vunpack.c.l.b16 %v128
  %v332 = vunpack.c.l.b16 %v129
  %v333 = vunpack.c.l.b16 %v130
  %v334 = vunpack.c.l.b16 %v131
  %v335 = vunpack.c.l.b16 %v132
  %v336 = vpack.c.b16 %v239, %v238
  %v337 = vpack.c.b16 %v241, %v240
  %v338 = vpack.c.b16 %v243, %v242
  %v339 = vpack.c.b16 %v245, %v244
  %v340 = vpack.c.b16 %v247, %v246
  %v341 = vpack.c.b16 %v249, %v248
  %v342 = vpack.c.b16 %v251, %v250
  %v343 = vpack.c.b16 %v253, %v252
  %v344 = vpack.c.b16 %v255, %v254
  %v345 = vpack.c.b16 %v257, %v256
  %v346 = vpack.c.b16 %v259, %v258
  %v347 = vpack.c.b16 %v261, %v260
  %v348 = vpack.c.b16 %v263, %v262
  %v349 = vpack.c.b16 %v265, %v264
  %v350 = vpack.c.b16 %v267, %v266
  %v351 = vpack.c.b16 %v269, %v268
  %v352 = vpack.c.b16 %v271, %v270
  %v353 = vpack.c.b16 %v273, %v272
  %v354 = vpack.c.b16 %v275, %v274
  %v355 = vpack.c.b16 %v277, %v276
  %v356 = vpack.c.b16 %v279, %v278
  %v357 = vpack.c.b16 %v281, %v280
  %v358 = vpack.c.b16 %v283, %v282
  %v359 = vpack.c.b16 %v285, %v284
  %v360 = vpack.c.b16 %v287, %v286
  %v361 = vpack.c.b16 %v289, %v288
  %v362 = vpack.c.b16 %v291, %v290
  %v363 = vpack.c.b16 %v293, %v292
  %v364 = vpack.c.b16 %v295, %v294
  %v365 = vpack.c.b16 %v297, %v296
  %v366 = vpack.c.b16 %v299, %v298
  %v367 = vpack.c.b16 %v301, %v300
  %v368 = vpack.c.b16 %v303, %v302
  %v369 = vpack.c.b16 %v305, %v304
  %v370 = vpack.c.b16 %v307, %v306
  %v371 = vpack.c.b16 %v309, %v308
  %v372 = vpack.c.b16 %v311, %v310
  %v373 = vpack.c.b16 %v313, %v312
  %v374 = vpack.c.b16 %v315, %v314
  %v375 = vpack.c.b16 %v317, %v316
  %v376 = vpack.c.b16 %v319, %v318
  %v377 = vpack.c.b16 %v321, %v320
  %v378 = vpack.c.b16 %v323, %v322
  %v379 = vpack.c.b16 %v325, %v324
  %v380 = vpack.c.b16 %v327, %v326
  %v381 = vpack.c.b16 %v329, %v328
  %v382 = vpack.c.b16 %v331, %v330
  %v383 = vpack.c.b16 %v333, %v332
  %v384 = vpack.c.b16 %v335, %v334
  %vm434 = vcmask 130048
  %v436 = vsel %vm434, %v34, 0
  %438 = vmatprep.subr.bf16.mxu0 0
  %439 = vmatpush1.bf16.msra.mxu0 %v336
  %440 = vmatprep.subr.bf16.mxu0 0
  %441 = vmatpush1.bf16.msra.mxu0 %v337
  %442 = vmatprep.subr.bf16.mxu0 0
  %443 = vmatpush1.bf16.msra.mxu0 %v338
  %444 = vmatprep.subr.bf16.mxu0 0
  %445 = vmatpush1.bf16.msra.mxu0 %v339
  %446 = vmatprep.subr.bf16.mxu0 0
  %447 = vmatpush1.bf16.msra.mxu0 %v340
  %448 = vmatprep.subr.bf16.mxu0 0
  %449 = vmatpush1.bf16.msra.mxu0 %v341
  %450 = vmatprep.subr.bf16.mxu0 0
  %451 = vmatpush1.bf16.msra.mxu0 %v342
  %452 = vmatprep.subr.bf16.mxu0 0
  %453 = vmatpush1.bf16.msra.mxu0 %v343
  %454 = vmatprep.subr.bf16.mxu0 0
  %455 = vmatpush1.bf16.msra.mxu0 %v344
  %456 = vmatprep.subr.bf16.mxu0 0
  %457 = vmatpush1.bf16.msra.mxu0 %v345
  %458 = vmatprep.subr.bf16.mxu0 0
  %459 = vmatpush1.bf16.msra.mxu0 %v346
  %460 = vmatprep.subr.bf16.mxu0 0
  %461 = vmatpush1.bf16.msra.mxu0 %v347
  %462 = vmatprep.subr.bf16.mxu0 0
  %463 = vmatpush1.bf16.msra.mxu0 %v348
  %464 = vmatprep.subr.bf16.mxu0 0
  %465 = vmatpush1.bf16.msra.mxu0 %v349
  %466 = vmatprep.subr.bf16.mxu0 0
  %467 = vmatpush1.bf16.msra.mxu0 %v350
  %468 = vmatprep.subr.bf16.mxu0 0
  %469 = vmatpush1.bf16.msra.mxu0 %v351
  %470 = vmatprep.mubr.bf16.mxu0 %v29
  %471 = vmatmul.mubr.bf16.gmra.mrb[0].mxu0 %v28
  %v472 = vpop.f32.mrb[0].mxu0
  %v473 = vadd.f32 %v138, %v472
  %v474 = vpop.f32.mrb[0].mxu0
  %v475 = vpop.f32.mrb[0].mxu0
  %v476 = vpop.f32.mrb[0].mxu0
  %477 = vdwg.mxu0
  %478 = vmatprep.subr.bf16.mxu0 0
  %479 = vmatpush1.bf16.msra.mxu0 %v352
  %480 = vmatprep.subr.bf16.mxu0 0
  %481 = vmatpush1.bf16.msra.mxu0 %v353
  %482 = vmatprep.subr.bf16.mxu0 0
  %483 = vmatpush1.bf16.msra.mxu0 %v354
  %484 = vmatprep.subr.bf16.mxu0 0
  %485 = vmatpush1.bf16.msra.mxu0 %v355
  %486 = vmatprep.subr.bf16.mxu0 0
  %487 = vmatpush1.bf16.msra.mxu0 %v356
  %488 = vmatprep.subr.bf16.mxu0 0
  %489 = vmatpush1.bf16.msra.mxu0 %v357
  %490 = vmatprep.subr.bf16.mxu0 0
  %491 = vmatpush1.bf16.msra.mxu0 %v358
  %492 = vmatprep.subr.bf16.mxu0 0
  %493 = vmatpush1.bf16.msra.mxu0 %v359
  %494 = vmatprep.subr.bf16.mxu0 0
  %495 = vmatpush1.bf16.msra.mxu0 %v360
  %496 = vmatprep.subr.bf16.mxu0 0
  %497 = vmatpush1.bf16.msra.mxu0 %v361
  %498 = vmatprep.subr.bf16.mxu0 0
  %499 = vmatpush1.bf16.msra.mxu0 %v362
  %500 = vmatprep.subr.bf16.mxu0 0
  %501 = vmatpush1.bf16.msra.mxu0 %v363
  %502 = vmatprep.subr.bf16.mxu0 0
  %503 = vmatpush1.bf16.msra.mxu0 %v364
  %504 = vmatprep.subr.bf16.mxu0 0
  %505 = vmatpush1.bf16.msra.mxu0 %v365
  %506 = vmatprep.subr.bf16.mxu0 0
  %507 = vmatpush1.bf16.msra.mxu0 %v366
  %508 = vmatprep.subr.bf16.mxu0 0
  %509 = vmatpush1.bf16.msra.mxu0 %v367
  %510 = vmatprep.mubr.bf16.mxu0 %v31
  %511 = vmatmul.mubr.bf16.gmra.mrb[0].mxu0 %v30
  %v512 = vpop.f32.mrb[0].mxu0
  %v513 = vadd.f32 %v473, %v512
  %v514 = vpop.f32.mrb[0].mxu0
  %v515 = vpop.f32.mrb[0].mxu0
  %v516 = vpop.f32.mrb[0].mxu0
  %517 = vdwg.mxu0
  %518 = vmatprep.subr.bf16.mxu0 0
  %519 = vmatpush1.bf16.msra.mxu0 %v368
  %520 = vmatprep.subr.bf16.mxu0 0
  %521 = vmatpush1.bf16.msra.mxu0 %v369
  %522 = vmatprep.subr.bf16.mxu0 0
  %523 = vmatpush1.bf16.msra.mxu0 %v370
  %524 = vmatprep.subr.bf16.mxu0 0
  %525 = vmatpush1.bf16.msra.mxu0 %v371
  %526 = vmatprep.subr.bf16.mxu0 0
  %527 = vmatpush1.bf16.msra.mxu0 %v372
  %528 = vmatprep.subr.bf16.mxu0 0
  %529 = vmatpush1.bf16.msra.mxu0 %v373
  %530 = vmatprep.subr.bf16.mxu0 0
  %531 = vmatpush1.bf16.msra.mxu0 %v374
  %532 = vmatprep.subr.bf16.mxu0 0
  %533 = vmatpush1.bf16.msra.mxu0 %v375
  %534 = vmatprep.subr.bf16.mxu0 0
  %535 = vmatpush1.bf16.msra.mxu0 %v376
  %536 = vmatprep.subr.bf16.mxu0 0
  %537 = vmatpush1.bf16.msra.mxu0 %v377
  %538 = vmatprep.subr.bf16.mxu0 0
  %539 = vmatpush1.bf16.msra.mxu0 %v378
  %540 = vmatprep.subr.bf16.mxu0 0
  %541 = vmatpush1.bf16.msra.mxu0 %v379
  %542 = vmatprep.subr.bf16.mxu0 0
  %543 = vmatpush1.bf16.msra.mxu0 %v380
  %544 = vmatprep.subr.bf16.mxu0 0
  %545 = vmatpush1.bf16.msra.mxu0 %v381
  %546 = vmatprep.subr.bf16.mxu0 0
  %547 = vmatpush1.bf16.msra.mxu0 %v382
  %548 = vmatprep.subr.bf16.mxu0 0
  %549 = vmatpush1.bf16.msra.mxu0 %v383
  %550 = vmatprep.mubr.bf16.mxu0 %v33
  %551 = vmatmul.mubr.bf16.gmra.mrb[0].mxu0 %v32
  %v552 = vpop.f32.mrb[0].mxu0
  %v553 = vadd.f32 %v513, %v552
  %v554 = vpop.f32.mrb[0].mxu0
  %v555 = vpop.f32.mrb[0].mxu0
  %v556 = vpop.f32.mrb[0].mxu0
  %557 = vdwg.mxu0
  %558 = vmatprep.subr.bf16.mxu0 0
  %559 = vmatpush1.bf16.msra.mxu0 %v384
  %560 = vmatprep.subr.bf16.mxu0 0
  %561 = vmatpush1.bf16.msra.mxu0 0
  %562 = vmatprep.subr.bf16.mxu0 0
  %563 = vmatpush1.bf16.msra.mxu0 0
  %564 = vmatprep.subr.bf16.mxu0 0
  %565 = vmatpush1.bf16.msra.mxu0 0
  %566 = vmatprep.subr.bf16.mxu0 0
  %567 = vmatpush1.bf16.msra.mxu0 0
  %568 = vmatprep.subr.bf16.mxu0 0
  %569 = vmatpush1.bf16.msra.mxu0 0
  %570 = vmatprep.subr.bf16.mxu0 0
  %571 = vmatpush1.bf16.msra.mxu0 0
  %572 = vmatprep.subr.bf16.mxu0 0
  %573 = vmatpush1.bf16.msra.mxu0 0
  %574 = vmatprep.subr.bf16.mxu0 0
  %575 = vmatpush1.bf16.msra.mxu0 0
  %576 = vmatprep.subr.bf16.mxu0 0
  %577 = vmatpush1.bf16.msra.mxu0 0
  %578 = vmatprep.subr.bf16.mxu0 0
  %579 = vmatpush1.bf16.msra.mxu0 0
  %580 = vmatprep.subr.bf16.mxu0 0
  %581 = vmatpush1.bf16.msra.mxu0 0
  %582 = vmatprep.subr.bf16.mxu0 0
  %583 = vmatpush1.bf16.msra.mxu0 0
  %584 = vmatprep.subr.bf16.mxu0 0
  %585 = vmatpush1.bf16.msra.mxu0 0
  %586 = vmatprep.subr.bf16.mxu0 0
  %587 = vmatpush1.bf16.msra.mxu0 0
  %588 = vmatprep.subr.bf16.mxu0 0
  %589 = vmatpush1.bf16.msra.mxu0 0
  %590 = vmatprep.mubr.bf16.mxu0 0
  %591 = vmatmul.mubr.bf16.gmra.mrb[0].mxu0 %v436
  %v592 = vpop.f32.mrb[0].mxu0
  %v593 = vadd.f32 %v553, %v592
  %v594 = vpop.f32.mrb[0].mxu0
  %v595 = vpop.f32.mrb[0].mxu0
  %v596 = vpop.f32.mrb[0].mxu0
  %597 = vdwg.mxu0
  %v598 = vmax.f32 %v593, 0.0
  %v599 = vpack.c.bf16 %v598, %v598
  %v600 = vld [vmem:[%s3] sm:$0xf]
  %v601 = vld [vmem:[%s3 + $0x4] sm:$0xf]
  %v602 = vld [vmem:[%s3 + $0x8] sm:$0xf]
  %v603 = vld [vmem:[%s3 + $0xc] sm:$0xf]
  %v604 = vld [vmem:[%s3 + $0x10] sm:$0xf]
  %v605 = vld [vmem:[%s3 + $0x14] sm:$0xf]
  %v606 = vld [vmem:[%s3 + $0x18] sm:$0xf]
  %v607 = vld [vmem:[%s3 + $0x1c] sm:$0xf]
  %v608 = vld [vmem:[%s3 + $0x20] sm:$0xf]
  %v609 = vld [vmem:[%s3 + $0x24] sm:$0xf]
  %v610 = vld [vmem:[%s3 + $0x28] sm:$0xf]
  %v611 = vld [vmem:[%s3 + $0x2c] sm:$0xf]
  %v612 = vld [vmem:[%s3 + $0x30] sm:$0xf]
  %v613 = vld [vmem:[%s3 + $0x34] sm:$0xf]
  %v614 = vld [vmem:[%s3 + $0x38] sm:$0xf]
  %v615 = vld [vmem:[%s3 + $0x3c] sm:$0xf]
  %v616 = vld [vmem:[%s4] sm:$0x1]
  %v618 = vlaneseq
  %v619 = vshrl.u32 %v618, 7
  %v620 = vsub.s32 0, %v619
  %v621 = vrot.slane %v616, %v620
  %v639 = vunpack.c.l.b16 %v600
  %v640 = vunpack.c.l.b16 %v601
  %v641 = vunpack.c.l.b16 %v602
  %v642 = vunpack.c.l.b16 %v603
  %v643 = vunpack.c.l.b16 %v604
  %v644 = vunpack.c.l.b16 %v605
  %v645 = vunpack.c.l.b16 %v606
  %v646 = vunpack.c.l.b16 %v607
  %v647 = vunpack.c.l.b16 %v608
  %v648 = vunpack.c.l.b16 %v609
  %v649 = vunpack.c.l.b16 %v610
  %v650 = vunpack.c.l.b16 %v611
  %v651 = vunpack.c.l.b16 %v612
  %v652 = vunpack.c.l.b16 %v613
  %v653 = vunpack.c.l.b16 %v614
  %v654 = vunpack.c.l.b16 %v615
  %v655 = vpack.c.b16 %v640, %v639
  %v656 = vpack.c.b16 %v642, %v641
  %v657 = vpack.c.b16 %v644, %v643
  %v658 = vpack.c.b16 %v646, %v645
  %v659 = vpack.c.b16 %v648, %v647
  %v660 = vpack.c.b16 %v650, %v649
  %v661 = vpack.c.b16 %v652, %v651
  %v662 = vpack.c.b16 %v654, %v653
  %671 = vmatprep.subr.bf16.mxu0 0
  %672 = vmatpush1.bf16.msra.mxu0 %v655
  %673 = vmatprep.subr.bf16.mxu0 0
  %674 = vmatpush1.bf16.msra.mxu0 %v656
  %675 = vmatprep.subr.bf16.mxu0 0
  %676 = vmatpush1.bf16.msra.mxu0 %v657
  %677 = vmatprep.subr.bf16.mxu0 0
  %678 = vmatpush1.bf16.msra.mxu0 %v658
  %679 = vmatprep.subr.bf16.mxu0 0
  %680 = vmatpush1.bf16.msra.mxu0 %v659
  %681 = vmatprep.subr.bf16.mxu0 0
  %682 = vmatpush1.bf16.msra.mxu0 %v660
  %683 = vmatprep.subr.bf16.mxu0 0
  %684 = vmatpush1.bf16.msra.mxu0 %v661
  %685 = vmatprep.subr.bf16.mxu0 0
  %686 = vmatpush1.bf16.msra.mxu0 %v662
  %687 = vmatprep.subr.bf16.mxu0 0
  %688 = vmatpush1.bf16.msra.mxu0 0
  %689 = vmatprep.subr.bf16.mxu0 0
  %690 = vmatpush1.bf16.msra.mxu0 0
  %691 = vmatprep.subr.bf16.mxu0 0
  %692 = vmatpush1.bf16.msra.mxu0 0
  %693 = vmatprep.subr.bf16.mxu0 0
  %694 = vmatpush1.bf16.msra.mxu0 0
  %695 = vmatprep.subr.bf16.mxu0 0
  %696 = vmatpush1.bf16.msra.mxu0 0
  %697 = vmatprep.subr.bf16.mxu0 0
  %698 = vmatpush1.bf16.msra.mxu0 0
  %699 = vmatprep.subr.bf16.mxu0 0
  %700 = vmatpush1.bf16.msra.mxu0 0
  %701 = vmatprep.subr.bf16.mxu0 0
  %702 = vmatpush1.bf16.msra.mxu0 0
  %703 = vmatprep.mubr.bf16.mxu0 0
  %704 = vmatmul.mubr.bf16.gmra.mrb[0].mxu0 %v599
  %v705 = vpop.f32.mrb[0].mxu0
  %v706 = vadd.f32 %v621, %v705
  %v707 = vpop.f32.mrb[0].mxu0
  %v708 = vpop.f32.mrb[0].mxu0
  %v709 = vpop.f32.mrb[0].mxu0
  %710 = vdwg.mxu0
  %v711 = vpack.c.bf16 %v706, %v706
  %712 = vst [vmem:[%s5] sm:$0xf] %v711
  // Predicated region
  $region22: #{neural_net_forward.1} parent=0 // pred_check
    _
  $region23: #{neural_net_forward.1} parent=0 // pred_check_branch
    %714 = sbr.rel (0) target = $region25
  $region24: #{neural_net_forward.1} parent=0 // pred_region
    _
  $region25: #{neural_net_forward.1} parent=0 // pred_fallthru
    _
  // Predicated region
  $region26: #{neural_net_forward.1} parent=0 // pred_check
    _
  $region27: #{neural_net_forward.1} parent=0 // pred_check_branch
    %716 = sbr.rel (0) target = $region29
  $region28: #{neural_net_forward.1} parent=0 // pred_region
    _
  $region29: #{neural_net_forward.1} parent=0 // pred_fallthru
    _

</llo_original>
